<compile_context>
chip_gen: v6e
topology: v6e:2x2x1
jax: 0.10.0
libtpu: 0.0.40
codegen_flags: <defaults>
</compile_context>

<pallas_src>
import math

import jax
import jax.numpy as jnp
from jax.experimental import pallas as pl
from jax.experimental.pallas import tpu as pltpu


IN_FEATURES = 6
HIDDEN = 40
OUT_FEATURES = 2
K_PAD = 8  # in-features padded to a sublane multiple; spare row 6 carries the bias


def _round_up(x, m):
    return (x + m - 1) // m * m


def _cdiv(a, b):
    return -(-a // b)


def _choose_tile(B, block_b, min_steps):
    """Pick (TB, Bp, nb): lane-multiple batch tile, padded batch, #grid steps."""
    Bp128 = _round_up(max(B, 1), 128)
    n128 = Bp128 // 128
    # Enough steps to respect the per-step VMEM cap, and >= min_steps (v7x
    # megacore) whenever there are at least that many 128-wide tiles.
    nb = max(min_steps, _cdiv(Bp128, block_b))
    nb = max(1, min(nb, n128))
    TB = _round_up(_cdiv(Bp128, nb), 128)
    nb = _cdiv(Bp128, TB)          # drop steps made redundant by rounding TB up
    return TB, TB * nb, nb


def fc_model_kernel(xt_ref, w1_ref, w2_ref, b2_ref, ot_ref):
    # xt: (8, TB)  rows 0..5 = x^T, row 6 = 1.0 (bias carrier), row 7 = 0
    # w1: (40, 8)  cols 0..5 = W1,  col 6 = b1,                 col 7 = 0
    # w2: (2, 40)  b2: (2, 1)  out: (2, TB)
    h = jnp.dot(w1_ref[...], xt_ref[...],
                preferred_element_type=jnp.float32)          # (40, TB), bias included
    h = jnp.maximum(h, 0.0)                                   # ReLU
    y = jnp.dot(w2_ref[...], h, preferred_element_type=jnp.float32)  # (2, TB)
    ot_ref[...] = (y + b2_ref[...]).astype(ot_ref.dtype)


def fc_model_forward_t(xt, w1, b1, w2, b2, *, block_b=32768, min_steps=2,
                       vmem_limit_bytes=None):
    """Transposed-interface forward: xt is (6, B) f32, returns (2, B) f32.

    Semantics: y = W2 @ relu(W1 @ x + b1) + b2   (== FC_Model.forward per column).
    w1: (40, 6)  b1: (40,)  w2: (2, 40)  b2: (2,)   (torch nn.Linear layouts)
    """
    assert xt.shape[0] == IN_FEATURES
    B = xt.shape[1]
    TB, Bp, nb = _choose_tile(B, block_b, min_steps)

    # Host-side layout plumbing (single pass): pad 6 -> 8 rows, bias row = 1.
    xt_p = jnp.zeros((K_PAD, Bp), xt.dtype)
    xt_p = xt_p.at[:IN_FEATURES, :B].set(xt)
    xt_p = xt_p.at[IN_FEATURES, :].set(1.0)

    # Augmented W1: spare column carries b1 (bias fold).
    w1p = jnp.zeros((HIDDEN, K_PAD), w1.dtype)
    w1p = w1p.at[:, :IN_FEATURES].set(w1)
    w1p = w1p.at[:, IN_FEATURES].set(b1)
    b2c = b2.reshape(OUT_FEATURES, 1)

    if vmem_limit_bytes is None:
        # Per step: 2x double-buffered x tile (64 B/col) + 2x y tile (16 B/col)
        # + f32 h temp (160 B/col) + weights + compiler headroom.
        vmem_limit_bytes = int(min(100 << 20, 240 * TB + (8 << 20)))

    cost = pl.CostEstimate(
        flops=2 * Bp * (K_PAD * HIDDEN + HIDDEN * OUT_FEATURES),
        transcendentals=0,
        bytes_accessed=4 * (Bp * (K_PAD + OUT_FEATURES)
                            + HIDDEN * (K_PAD + OUT_FEATURES) + OUT_FEATURES),
    )

    yt = pl.pallas_call(
        fc_model_kernel,
        out_shape=jax.ShapeDtypeStruct((OUT_FEATURES, Bp), xt.dtype),
        grid=(nb,),
        in_specs=[
            pl.BlockSpec((K_PAD, TB), lambda i: (0, i)),              # x tile: streamed
            pl.BlockSpec((HIDDEN, K_PAD), lambda i: (0, 0)),          # weights: resident
            pl.BlockSpec((OUT_FEATURES, HIDDEN), lambda i: (0, 0)),
            pl.BlockSpec((OUT_FEATURES, 1), lambda i: (0, 0)),
        ],
        out_specs=pl.BlockSpec((OUT_FEATURES, TB), lambda i: (0, i)),  # lane-dense stores
        compiler_params=pltpu.CompilerParams(
            dimension_semantics=("parallel",),       # shards grid over v7x's 2 TCs
            vmem_limit_bytes=vmem_limit_bytes),
        cost_estimate=cost,
    )(xt_p, w1p, w2, b2c)

    return yt[:, :B]


def fc_model_forward(x, w1, b1, w2, b2, **kw):
    """PyTorch-layout convenience wrapper: x (B, 6) -> (B, 2).

    Prefer fc_model_forward_t in a larger graph: the two transposes here are
    pure HBM traffic that the kernel cannot hide for this memory-bound op.
    """
    return fc_model_forward_t(x.T, w1, b1, w2, b2, **kw).T


def init_params(key):
    """Deterministic init mirroring nn.Linear's uniform(-1/sqrt(fan_in), 1/sqrt(fan_in))."""
    k1, k2, k3, k4 = jax.random.split(key, 4)
    bound1 = 1.0 / math.sqrt(IN_FEATURES)
    bound2 = 1.0 / math.sqrt(HIDDEN)
    w1 = jax.random.uniform(k1, (HIDDEN, IN_FEATURES), jnp.float32, -bound1, bound1)
    b1 = jax.random.uniform(k2, (HIDDEN,), jnp.float32, -bound1, bound1)
    w2 = jax.random.uniform(k3, (OUT_FEATURES, HIDDEN), jnp.float32, -bound2, bound2)
    b2 = jax.random.uniform(k4, (OUT_FEATURES,), jnp.float32, -bound2, bound2)
    return w1, b1, w2, b2


def _reference(x, w1, b1, w2, b2):
    return jnp.maximum(x @ w1.T + b1, 0.0) @ w2.T + b2


if __name__ == "__main__":
    key = jax.random.PRNGKey(0)
    kx, kx2, kp = jax.random.split(key, 3)
    w1, b1, w2, b2 = init_params(kp)

    ok = True
    # Small batch (single tile) and a batch that is not a multiple of 128
    # (exercises the >=2-step grid, batch padding, and slicing path).
    for kk, B in ((kx, 8), (kx2, 300)):
        x = jax.random.normal(kk, (B, IN_FEATURES), jnp.float32)
        ref = _reference(x, w1, b1, w2, b2)

        out = jax.block_until_ready(fc_model_forward(x, w1, b1, w2, b2))
        ok &= out.shape == (B, OUT_FEATURES)
        ok &= bool(jnp.allclose(out, ref, atol=1e-5, rtol=1e-5))

        # Preferred transposed interface: (6, B) in, (2, B) out.
        out_t = jax.block_until_ready(fc_model_forward_t(x.T, w1, b1, w2, b2))
        ok &= out_t.shape == (OUT_FEATURES, B)
        ok &= bool(jnp.allclose(out_t, ref.T, atol=1e-5, rtol=1e-5))

    assert ok
    print("KERNEL_OK")
</pallas_src>

<mosaic_0001>
module attributes {stable_mosaic.version = 11 : i64} {
  func.func @fc_model_kernel(%arg0: i32, %arg1: memref<8x128xf32, #tpu.memory_space<vmem>>, %arg2: memref<40x8xf32, #tpu.memory_space<vmem>>, %arg3: memref<2x40xf32, #tpu.memory_space<vmem>>, %arg4: memref<2x1xf32, #tpu.memory_space<vmem>>, %arg5: memref<2x128xf32, #tpu.memory_space<vmem>>) attributes {dimension_semantics = [#tpu.dimension_semantics<parallel>], iteration_bounds = array<i64: 1>, scalar_prefetch = 0 : i64, scratch_operands = 0 : i64, tpu.core_type = #tpu.core_type<tc>, window_params = [{transform_indices = @transform_0, window_bounds = array<i64: 8, 128>}, {pipeline_mode = #tpu.pipeline_mode<synchronous>, transform_indices = @transform_1, window_bounds = array<i64: 40, 8>}, {pipeline_mode = #tpu.pipeline_mode<synchronous>, transform_indices = @transform_2, window_bounds = array<i64: 2, 40>}, {pipeline_mode = #tpu.pipeline_mode<synchronous>, transform_indices = @transform_3, window_bounds = array<i64: 2, 1>}, {transform_indices = @transform_4, window_bounds = array<i64: 2, 128>}]} {
    %c0 = arith.constant 0 : index
    %c0_0 = arith.constant 0 : index
    %0 = vector.load %arg2[%c0, %c0_0] : memref<40x8xf32, #tpu.memory_space<vmem>>, vector<40x8xf32>
    %c0_1 = arith.constant 0 : index
    %c0_2 = arith.constant 0 : index
    %1 = vector.load %arg1[%c0_1, %c0_2] : memref<8x128xf32, #tpu.memory_space<vmem>>, vector<8x128xf32>
    %cst = arith.constant dense<0.000000e+00> : vector<40x128xf32>
    %2 = tpu.matmul %0, %1, %cst {dimension_numbers = #tpu.dot_dimension_numbers<[1], [0], [0], [1], [0, 0, 1, 1], [], []>} : vector<40x8xf32>, vector<8x128xf32>, vector<40x128xf32> -> vector<40x128xf32>
    %cst_3 = arith.constant 0.000000e+00 : f32
    %3 = vector.broadcast %cst_3 : f32 to vector<40x128xf32>
    %4 = arith.maximumf %2, %3 : vector<40x128xf32>
    %c0_4 = arith.constant 0 : index
    %c0_5 = arith.constant 0 : index
    %5 = vector.load %arg3[%c0_4, %c0_5] : memref<2x40xf32, #tpu.memory_space<vmem>>, vector<2x40xf32>
    %cst_6 = arith.constant dense<0.000000e+00> : vector<2x128xf32>
    %6 = tpu.matmul %5, %4, %cst_6 {dimension_numbers = #tpu.dot_dimension_numbers<[1], [0], [0], [1], [0, 0, 1, 1], [], []>} : vector<2x40xf32>, vector<40x128xf32>, vector<2x128xf32> -> vector<2x128xf32>
    %c0_7 = arith.constant 0 : index
    %c0_8 = arith.constant 0 : index
    %7 = vector.load %arg4[%c0_7, %c0_8] : memref<2x1xf32, #tpu.memory_space<vmem>>, vector<2x1xf32>
    %8 = vector.broadcast %7 : vector<2x1xf32> to vector<2x128xf32>
    %9 = arith.addf %6, %8 : vector<2x128xf32>
    %c0_9 = arith.constant 0 : index
    %c0_10 = arith.constant 0 : index
    %10 = vector.load %arg5[%c0_9, %c0_10] : memref<2x128xf32, #tpu.memory_space<vmem>>, vector<2x128xf32>
    tpu.vector_store %arg5[%c0_9, %c0_10], %9 {strides = array<i32>} : memref<2x128xf32, #tpu.memory_space<vmem>>, vector<2x128xf32>,
    return
  }
  func.func @transform_0(%arg0: i32) -> (i32, i32) {
    %c0_i32 = arith.constant 0 : i32
    %c0_i32_0 = arith.constant 0 : i32
    return %c0_i32, %arg0 : i32, i32
  }
  func.func @transform_1(%arg0: i32) -> (i32, i32) {
    %c0_i32 = arith.constant 0 : i32
    %c0_i32_0 = arith.constant 0 : i32
    %c0_i32_1 = arith.constant 0 : i32
    return %c0_i32, %c0_i32_0 : i32, i32
  }
  func.func @transform_2(%arg0: i32) -> (i32, i32) {
    %c0_i32 = arith.constant 0 : i32
    %c0_i32_0 = arith.constant 0 : i32
    %c0_i32_1 = arith.constant 0 : i32
    return %c0_i32, %c0_i32_0 : i32, i32
  }
  func.func @transform_3(%arg0: i32) -> (i32, i32) {
    %c0_i32 = arith.constant 0 : i32
    %c0_i32_0 = arith.constant 0 : i32
    %c0_i32_1 = arith.constant 0 : i32
    return %c0_i32, %c0_i32_0 : i32, i32
  }
  func.func @transform_4(%arg0: i32) -> (i32, i32) {
    %c0_i32 = arith.constant 0 : i32
    %c0_i32_0 = arith.constant 0 : i32
    return %c0_i32, %arg0 : i32, i32
  }
}

</mosaic_0001>

<llo_original>
// kernel: tpu_custom_call.1
$region0: #{tpu_custom_call.1}
  #allocation0 [shape = 'u32[]', space=smem, size = 0x4, offset = 0x4, fixed_abs, tag = 'smem constant byte address 0x4 - core index']
  #allocation1 [shape = 'u32[144,128]{1,0:T(1,128)}', space=vmem, size = 0x12000, scoped, tag = 'internal scratch']
  %s0 = inlined_call_operand.vmem [shape: f32[8,128], index: 0, kind: input, shape index: {}]
  %s1 = inlined_call_operand.vmem [shape: f32[40,8], index: 1, kind: input, shape index: {}]
  %s2 = inlined_call_operand.vmem [shape: f32[2,40], index: 2, kind: input, shape index: {}]
  %s3 = inlined_call_operand.vmem [shape: f32[2,1], index: 3, kind: input, shape index: {}]
  %s4 = inlined_call_operand.hbm [shape: f32[2,128], index: 4, kind: output, shape index: {}]
  %s5 = sld [smem:[#allocation0]]
  $region26: #{tpu_custom_call.1} parent=0
    _
  %s7 = ssub.s32 1, %s5
  %s8 = scalar_select 0, %s7, %s5
  $region1: #{tpu_custom_call.1} parent=0
    #allocation2 [shape = 'u8[1024]{0}', space=vmem, size = 0x400, scoped, tag = 'output window, operand 0, single buffered']
    #allocation3 [shape = 's32[1]{0}', space=sflag, size = 0x4, scoped, tag = 'scoped memory for tpu_custom_call.1']
    %9 = vsyncpa [#allocation3], 0
    // Predicated region
    $region2: #{tpu_custom_call.1} parent=1 // pred_check
      _
    $region3: #{tpu_custom_call.1} parent=1 // pred_check_branch
      %11 = sbr.rel (0) target = $region5
    $region4: #{tpu_custom_call.1} parent=1 // pred_region
      _
    $region5: #{tpu_custom_call.1} parent=1 // pred_fallthru
      _
    // Predicated region
    $region6: #{tpu_custom_call.1} parent=1 // pred_check
      _
    $region7: #{tpu_custom_call.1} parent=1 // pred_check_branch
      %13 = sbr.rel (0) target = $region9
    $region8: #{tpu_custom_call.1} parent=1 // pred_region
      _
    $region9: #{tpu_custom_call.1} parent=1 // pred_fallthru
      _
    // Predicated region
    $region10: #{tpu_custom_call.1} parent=1 // pred_check
      _
    $region11: #{tpu_custom_call.1} parent=1 // pred_check_branch
      %15 = sbr.rel (0) target = $region13
    $region12: #{tpu_custom_call.1} parent=1 // pred_region
      _
    $region13: #{tpu_custom_call.1} parent=1 // pred_fallthru
      _
    // Predicated region
    $region14: #{tpu_custom_call.1} parent=1 // pred_check
      _
    $region15: #{tpu_custom_call.1} parent=1 // pred_check_branch
      %17 = sbr.rel (0) target = $region17
    $region16: #{tpu_custom_call.1} parent=1 // pred_region
      _
    $region17: #{tpu_custom_call.1} parent=1 // pred_fallthru
      _
    %v18 = vld [vmem:[%s1] sm:$0xff]
    %v19 = vld [vmem:[%s1 + $0x8] sm:$0xff]
    %v20 = vld [vmem:[%s1 + $0x10] sm:$0xff]
    %v21 = vld [vmem:[%s1 + $0x18] sm:$0xff]
    %v22 = vld [vmem:[%s1 + $0x20] sm:$0xff]
    %v23 = vld [vmem:[%s0] sm:$0xff]
    %vm24 = vcmask 64512
    %v26 = vsel %vm24, %v18, 0
    %v29 = vsel %vm24, %v19, 0
    %v32 = vsel %vm24, %v20, 0
    %v35 = vsel %vm24, %v21, 0
    %v38 = vsel %vm24, %v22, 0
    %40 = vmatprep.subr.mxu0 0.0
    %41 = vmatpush1.msra.mxu0 0.0
    %42 = vmatprep.subr.mxu0 0.0
    %43 = vmatpush1.msra.mxu0 0.0
    %44 = vmatprep.subr.mxu0 0.0
    %45 = vmatpush1.msra.mxu0 0.0
    %46 = vmatprep.subr.mxu0 0.0
    %47 = vmatpush1.msra.mxu0 0.0
    %48 = vmatprep.subr.mxu0 0.0
    %49 = vmatpush1.msra.mxu0 0.0
    %50 = vmatprep.subr.mxu0 0.0
    %51 = vmatpush1.msra.mxu0 0.0
    %52 = vmatprep.subr.mxu0 0.0
    %53 = vmatpush1.msra.mxu0 0.0
    %54 = vmatprep.subr.mxu0 0.0
    %55 = vmatpush1.msra.mxu0 0.0
    %56 = vmatprep.subr.mxu0 0.0
    %57 = vmatpush1.msra.mxu0 0.0
    %58 = vmatprep.subr.mxu0 0.0
    %59 = vmatpush1.msra.mxu0 0.0
    %60 = vmatprep.subr.mxu0 0.0
    %61 = vmatpush1.msra.mxu0 0.0
    %62 = vmatprep.subr.mxu0 0.0
    %63 = vmatpush1.msra.mxu0 0.0
    %64 = vmatprep.subr.mxu0 0.0
    %65 = vmatpush1.msra.mxu0 0.0
    %66 = vmatprep.subr.mxu0 0.0
    %67 = vmatpush1.msra.mxu0 0.0
    %68 = vmatprep.subr.mxu0 0.0
    %69 = vmatpush1.msra.mxu0 0.0
    %70 = vmatprep.subr.mxu0 0.0
    %71 = vmatpush1.msra.mxu0 %v23
    %72 = vmatprep.subr.mxu0 0.0
    %73 = vmatpush2.msra.mxu0 0.0
    %74 = vmatprep.subr.mxu0 0.0
    %75 = vmatpush2.msra.mxu0 0.0
    %76 = vmatprep.subr.mxu0 0.0
    %77 = vmatpush2.msra.mxu0 0.0
    %78 = vmatprep.subr.mxu0 0.0
    %79 = vmatpush2.msra.mxu0 0.0
    %80 = vmatprep.subr.mxu0 0.0
    %81 = vmatpush2.msra.mxu0 0.0
    %82 = vmatprep.subr.mxu0 0.0
    %83 = vmatpush2.msra.mxu0 0.0
    %84 = vmatprep.subr.mxu0 0.0
    %85 = vmatpush2.msra.mxu0 0.0
    %86 = vmatprep.subr.mxu0 0.0
    %87 = vmatpush2.msra.mxu0 0.0
    %88 = vmatprep.subr.mxu0 0.0
    %89 = vmatpush2.msra.mxu0 0.0
    %90 = vmatprep.subr.mxu0 0.0
    %91 = vmatpush2.msra.mxu0 0.0
    %92 = vmatprep.subr.mxu0 0.0
    %93 = vmatpush2.msra.mxu0 0.0
    %94 = vmatprep.subr.mxu0 0.0
    %95 = vmatpush2.msra.mxu0 0.0
    %96 = vmatprep.subr.mxu0 0.0
    %97 = vmatpush2.msra.mxu0 0.0
    %98 = vmatprep.subr.mxu0 0.0
    %99 = vmatpush2.msra.mxu0 0.0
    %100 = vmatprep.subr.mxu0 0.0
    %101 = vmatpush2.msra.mxu0 0.0
    %102 = vmatprep.subr.mxu0 0.0
    %103 = vmatpush2.msra.mxu0 0.0
    %104 = vmatprep.mubr.f32.mxu0 0.0
    %105 = vmatmul.mubr.f32.gmra.mxu0 %v26
    %v106 = vpop.f32.mrf.mxu0
    %v107 = vadd.f32 0.0, %v106
    %v108 = vpop.f32.mrf.mxu0
    %109 = vmatprep.mubr.f32.mxu0 0.0
    %110 = vmatmul.mubr.f32.gmra.mxu0 %v29
    %v111 = vpop.f32.mrf.mxu0
    %v112 = vadd.f32 0.0, %v111
    %v113 = vpop.f32.mrf.mxu0
    %114 = vmatprep.mubr.f32.mxu0 0.0
    %115 = vmatmul.mubr.f32.gmra.mxu0 %v32
    %v116 = vpop.f32.mrf.mxu0
    %v117 = vadd.f32 0.0, %v116
    %v118 = vpop.f32.mrf.mxu0
    %119 = vmatprep.mubr.f32.mxu0 0.0
    %120 = vmatmul.mubr.f32.gmra.mxu0 %v35
    %v121 = vpop.f32.mrf.mxu0
    %v122 = vadd.f32 0.0, %v121
    %v123 = vpop.f32.mrf.mxu0
    %124 = vmatprep.mubr.f32.mxu0 0.0
    %125 = vmatmul.mubr.f32.gmra.mxu0 %v38
    %v126 = vpop.f32.mrf.mxu0
    %v127 = vadd.f32 0.0, %v126
    %v128 = vpop.f32.mrf.mxu0
    %129 = vdwg.mxu0
    %v130 = vmax.f32 %v107, 0.0
    %v131 = vmax.f32 %v112, 0.0
    %v132 = vmax.f32 %v117, 0.0
    %v133 = vmax.f32 %v122, 0.0
    %v134 = vmax.f32 %v127, 0.0
    %v135 = vld [vmem:[%s2] sm:$0x3]
    %v136 = vld [vmem:[%s3] sm:$0x3]
    %138 = vset.pattern.permute.xlu0 0
    %139 = vperm.xlu0 %138, %v136
    %v140 = vpop.permute.xlu0 %139
    %vm142 = vcmask 326656
    %v144 = vsel %vm142, %v135, 0
    %146 = vmatprep.subr.mxu0 0.0
    %147 = vmatpush1.msra.mxu0 0.0
    %148 = vmatprep.subr.mxu0 0.0
    %149 = vmatpush1.msra.mxu0 0.0
    %150 = vmatprep.subr.mxu0 0.0
    %151 = vmatpush1.msra.mxu0 0.0
    %152 = vmatprep.subr.mxu0 0.0
    %153 = vmatpush1.msra.mxu0 0.0
    %154 = vmatprep.subr.mxu0 0.0
    %155 = vmatpush1.msra.mxu0 0.0
    %156 = vmatprep.subr.mxu0 0.0
    %157 = vmatpush1.msra.mxu0 0.0
    %158 = vmatprep.subr.mxu0 0.0
    %159 = vmatpush1.msra.mxu0 0.0
    %160 = vmatprep.subr.mxu0 0.0
    %161 = vmatpush1.msra.mxu0 0.0
    %162 = vmatprep.subr.mxu0 0.0
    %163 = vmatpush1.msra.mxu0 0.0
    %164 = vmatprep.subr.mxu0 0.0
    %165 = vmatpush1.msra.mxu0 0.0
    %166 = vmatprep.subr.mxu0 0.0
    %167 = vmatpush1.msra.mxu0 0.0
    %168 = vmatprep.subr.mxu0 0.0
    %169 = vmatpush1.msra.mxu0 %v134
    %170 = vmatprep.subr.mxu0 0.0
    %171 = vmatpush1.msra.mxu0 %v133
    %172 = vmatprep.subr.mxu0 0.0
    %173 = vmatpush1.msra.mxu0 %v132
    %174 = vmatprep.subr.mxu0 0.0
    %175 = vmatpush1.msra.mxu0 %v131
    %176 = vmatprep.subr.mxu0 0.0
    %177 = vmatpush1.msra.mxu0 %v130
    %178 = vmatprep.subr.mxu0 0.0
    %179 = vmatpush2.msra.mxu0 0.0
    %180 = vmatprep.subr.mxu0 0.0
    %181 = vmatpush2.msra.mxu0 0.0
    %182 = vmatprep.subr.mxu0 0.0
    %183 = vmatpush2.msra.mxu0 0.0
    %184 = vmatprep.subr.mxu0 0.0
    %185 = vmatpush2.msra.mxu0 0.0
    %186 = vmatprep.subr.mxu0 0.0
    %187 = vmatpush2.msra.mxu0 0.0
    %188 = vmatprep.subr.mxu0 0.0
    %189 = vmatpush2.msra.mxu0 0.0
    %190 = vmatprep.subr.mxu0 0.0
    %191 = vmatpush2.msra.mxu0 0.0
    %192 = vmatprep.subr.mxu0 0.0
    %193 = vmatpush2.msra.mxu0 0.0
    %194 = vmatprep.subr.mxu0 0.0
    %195 = vmatpush2.msra.mxu0 0.0
    %196 = vmatprep.subr.mxu0 0.0
    %197 = vmatpush2.msra.mxu0 0.0
    %198 = vmatprep.subr.mxu0 0.0
    %199 = vmatpush2.msra.mxu0 0.0
    %200 = vmatprep.subr.mxu0 0.0
    %201 = vmatpush2.msra.mxu0 0.0
    %202 = vmatprep.subr.mxu0 0.0
    %203 = vmatpush2.msra.mxu0 0.0
    %204 = vmatprep.subr.mxu0 0.0
    %205 = vmatpush2.msra.mxu0 0.0
    %206 = vmatprep.subr.mxu0 0.0
    %207 = vmatpush2.msra.mxu0 0.0
    %208 = vmatprep.subr.mxu0 0.0
    %209 = vmatpush2.msra.mxu0 0.0
    %210 = vmatprep.mubr.f32.mxu0 0.0
    %211 = vmatmul.mubr.f32.gmra.mxu0 %v144
    %v212 = vpop.f32.mrf.mxu0
    %v213 = vadd.f32 %v140, %v212
    %v214 = vpop.f32.mrf.mxu0
    %215 = vdwg.mxu0
    %216 = vst [vmem:[#allocation2] sm:$0x3] %v213
    // Predicated region
    $region18: #{tpu_custom_call.1} parent=1 // pred_check
      _
    $region19: #{tpu_custom_call.1} parent=1 // pred_check_branch
      %218 = sbr.rel (0) target = $region21
    $region20: #{tpu_custom_call.1} parent=1 // pred_region
      %s220 = ssub.s32 32, 32
      %221 = vsyncadd [#allocation3], %s220
      %s223 = sshll.u32 [#allocation2], 4
      %s224 = int_to_ptr.vmem [resolvable:$true] %s223
      %226 = dma.vmem_to_hbm [thread:$0]  %s224, 32, %s4, [#allocation3]
    $region21: #{tpu_custom_call.1} parent=1 // pred_fallthru
      _
    // Predicated region
    $region22: #{tpu_custom_call.1} parent=1 // pred_check
      _
    $region23: #{tpu_custom_call.1} parent=1 // pred_check_branch
      %228 = sbr.rel (0) target = $region25
    $region24: #{tpu_custom_call.1} parent=1 // pred_region
      %229 = dma.done [#allocation3], 32
    $region25: #{tpu_custom_call.1} parent=1 // pred_fallthru
      _
    %230 = vsyncpa [#allocation3], 1

</llo_original>
